<compile_context>
chip_gen: v6e
topology: v6e:2x2x1
jax: 0.10.0
libtpu: 0.0.40
codegen_flags: <defaults>
</compile_context>

<pallas_src>
import jax
import jax.numpy as jnp
from jax.experimental import pallas as pl
from jax.experimental.pallas import tpu as pltpu


def _round_up(n, m):
    return int(pl.cdiv(n, m)) * m


# --------------------------------------------------------------------------
# Kernel
# --------------------------------------------------------------------------
def _mdg_kernel(x_ref, w1_ref, w2_ref, bias_ref, mean_ref):
    """Fused trunk + action heads.  bias_ref packs [b1; b2] rows."""
    Hp = w1_ref.shape[1]          # hidden width, padded to a multiple of 128
    AO = mean_ref.shape[1]        # num_actions * num_outputs (unpadded)

    # Shared trunk: Linear + ReLU  (MXU matmul + VPU max).
    h = jnp.dot(x_ref[...], w1_ref[...], preferred_element_type=jnp.float32)
    h = jnp.maximum(h + bias_ref[0:1, :Hp], 0.0)

    # Fused action-head means; output width AO (=12) is the full array dim.
    means = jnp.dot(h, w2_ref[...], preferred_element_type=jnp.float32)
    mean_ref[...] = (means + bias_ref[1:2, :AO]).astype(mean_ref.dtype)


# --------------------------------------------------------------------------
# One-time parameter preparation (hoisted out of the forward path)
# --------------------------------------------------------------------------
def prepare_params(w1, b1, w2_cat, b2_cat, logstd_cat, weight_dtype=jnp.float32):
    """Pad hidden width to 128, pack biases into one DMA, precompute std.

    Called once when the parameters change, never per forward step.
    weight_dtype: set jnp.bfloat16 on v5e/v6e (see TODO at top) — resident
    weight DMA halves; accumulation stays f32 in the kernel.
    """
    I, H = w1.shape
    AO = w2_cat.shape[1]

    Hp = _round_up(H, 128)                              # full-lane hidden width
    w1_p = jnp.pad(w1, ((0, 0), (0, Hp - H))).astype(weight_dtype)
    w2_p = jnp.pad(w2_cat, ((0, Hp - H), (0, 0))).astype(weight_dtype)

    PW = _round_up(max(Hp, AO), 128)                    # packed-bias lane width
    bias_packed = (jnp.zeros((2, PW), jnp.float32)
                   .at[0, :H].set(b1.reshape(-1))
                   .at[1, :AO].set(b2_cat.reshape(-1)))

    # std = exp(logstd) is independent of x (AddBias(zeros) + exp semantics):
    # compute once here, shape (1, AO); never broadcast to (B, AO).
    std_cat = jnp.exp(logstd_cat.reshape(1, -1)).astype(jnp.float32)

    return {
        "w1": w1_p, "w2": w2_p, "bias": bias_packed, "std": std_cat,
        "num_inputs": I, "hidden_pad": Hp, "ao": AO,
    }


# --------------------------------------------------------------------------
# Forward
# --------------------------------------------------------------------------
def multi_action_diag_gaussian_forward(params, x, *, max_tile=1024,
                                       min_grid_steps=2):
    """Fused forward.  Returns (mean_cat (B, AO), std_cat (1, AO))."""
    B, I = x.shape
    assert I == params["num_inputs"]
    Hp = params["hidden_pad"]
    AO = params["ao"]
    PW = params["bias"].shape[1]

    # --- batch tiling ------------------------------------------------------
    # Derive TB from B: at least `min_grid_steps` grid steps whenever B allows
    # (keeps both v7x TensorCores busy); cap tile rows at `max_tile`; pad the
    # batch only up to the next TB multiple (jnp.pad, one op).
    n_steps = max(min_grid_steps, int(pl.cdiv(B, max_tile)))
    TB = _round_up(int(pl.cdiv(B, n_steps)), 8)
    n_steps = int(pl.cdiv(B, TB))
    B_pad = n_steps * TB
    x_pad = x if B_pad == B else jnp.pad(x, ((0, B_pad - B), (0, 0)))

    # --- explicit VMEM budget (v7x: 64 MiB physical / ~32 MiB scoped) -------
    lane = 128
    vmem_est = 4 * (2 * TB * max(I, lane)        # x tile, double-buffered
                    + 2 * TB * lane              # out tile (lane-padded), x2
                    + I * Hp + Hp * lane         # resident weights
                    + 2 * PW)                    # packed biases
    vmem_limit = int(min(max(2 * vmem_est, 16 << 20), 64 << 20))

    mean_pad = pl.pallas_call(
        _mdg_kernel,
        out_shape=jax.ShapeDtypeStruct((B_pad, AO), jnp.float32),
        grid_spec=pltpu.PrefetchScalarGridSpec(
            num_scalar_prefetch=0,
            grid=(n_steps,),
            in_specs=[
                pl.BlockSpec((TB, I), lambda i: (i, 0)),    # x tile
                pl.BlockSpec((I, Hp), lambda i: (0, 0)),    # w1 (resident)
                pl.BlockSpec((Hp, AO), lambda i: (0, 0)),   # w2 (resident)
                pl.BlockSpec((2, PW), lambda i: (0, 0)),    # packed biases
            ],
            out_specs=pl.BlockSpec((TB, AO), lambda i: (i, 0)),
        ),
        compiler_params=pltpu.CompilerParams(
            dimension_semantics=("parallel",),
            vmem_limit_bytes=vmem_limit),
    )(x_pad, params["w1"], params["w2"], params["bias"])

    mean_cat = mean_pad if B_pad == B else mean_pad[:B]
    return mean_cat, params["std"]


def as_distributions(mean_cat, std_cat, num_actions, num_outputs):
    """Per-head (mean, std) sufficient statistics.

    std stays at shape (1, num_outputs) — Normal broadcasts lazily, so no
    (B, num_outputs) std copy is ever materialized.
    """
    dists = []
    for a in range(num_actions):
        sl = slice(a * num_outputs, (a + 1) * num_outputs)
        dists.append((mean_cat[:, sl], std_cat[:, sl]))
    return dists


# --------------------------------------------------------------------------
# Demo / correctness check
# --------------------------------------------------------------------------
def _orthogonal(key, shape, gain):
    # Deterministic orthogonal init (mirrors nn.init.orthogonal_).
    rows, cols = shape
    n = max(rows, cols)
    a = jax.random.normal(key, (n, n), dtype=jnp.float32)
    q, _ = jnp.linalg.qr(a)
    return gain * q[:rows, :cols]


if __name__ == "__main__":
    # Module hyperparameters (small, consistent with the PyTorch module).
    num_inputs = 32
    hidden_size = 64
    num_outputs = 4
    num_actions = 3
    gain = 0.01
    batch = 8

    key = jax.random.PRNGKey(0)
    k_x, k_w1, k_w2 = jax.random.split(key, 3)

    # Input: (batch, num_inputs)
    x = jax.random.normal(k_x, (batch, num_inputs), dtype=jnp.float32)

    # fc_shared: Linear(num_inputs, hidden_size), orthogonal init, zero bias.
    # Stored as (in, out) — transpose of PyTorch's (out, in).
    w1 = _orthogonal(k_w1, (num_inputs, hidden_size), gain)
    b1 = jnp.zeros((hidden_size,), dtype=jnp.float32)

    # fc_means: num_actions x Linear(hidden_size, num_outputs), concatenated
    # along the output axis → (hidden, num_actions * num_outputs).
    w2_heads = []
    for _ in range(num_actions):
        k_w2, sub = jax.random.split(k_w2)
        w2_heads.append(_orthogonal(sub, (hidden_size, num_outputs), gain))
    w2_cat = jnp.concatenate(w2_heads, axis=1)
    b2_cat = jnp.zeros((num_actions * num_outputs,), dtype=jnp.float32)

    # logstds: AddBias(torch.zeros(num_outputs)) per action → zeros.
    logstd_cat = jnp.zeros((num_actions * num_outputs,), dtype=jnp.float32)

    # One-time parameter prep (hoisted out of the forward path).
    params = prepare_params(w1, b1, w2_cat, b2_cat, logstd_cat)

    mean_cat, std_cat = multi_action_diag_gaussian_forward(params, x)
    mean_cat = jax.block_until_ready(mean_cat)

    # Pure-JAX reference check.
    h_ref = jnp.maximum(x @ w1 + b1[None, :], 0.0)
    means_ref = h_ref @ w2_cat + b2_cat[None, :]
    std_ref = jnp.exp(logstd_cat)[None, :]

    ok = bool(jnp.allclose(mean_cat, means_ref, atol=1e-5))
    ok &= bool(jnp.allclose(std_cat, std_ref, atol=1e-5))
    assert mean_cat.shape == (batch, num_actions * num_outputs)
    assert std_cat.shape == (1, num_actions * num_outputs)

    dists = as_distributions(mean_cat, std_cat, num_actions, num_outputs)
    for a, (m, s) in enumerate(dists):
        sl = slice(a * num_outputs, (a + 1) * num_outputs)
        ok &= bool(jnp.allclose(m, means_ref[:, sl], atol=1e-5))
        ok &= bool(jnp.allclose(s, std_ref[:, sl], atol=1e-5))
        assert m.shape == (batch, num_outputs)
        assert s.shape == (1, num_outputs)   # std not broadcast to (B, ·)

    assert ok, "mismatch vs pure-JAX reference"
    print("KERNEL_OK")
</pallas_src>

<mosaic_0001>
module attributes {stable_mosaic.version = 11 : i64} {
  func.func @_mdg_kernel(%arg0: i32, %arg1: memref<8x32xf32, #tpu.memory_space<vmem>>, %arg2: memref<32x128xf32, #tpu.memory_space<vmem>>, %arg3: memref<128x12xf32, #tpu.memory_space<vmem>>, %arg4: memref<2x128xf32, #tpu.memory_space<vmem>>, %arg5: memref<8x12xf32, #tpu.memory_space<vmem>>) attributes {dimension_semantics = [#tpu.dimension_semantics<parallel>], iteration_bounds = array<i64: 1>, scalar_prefetch = 0 : i64, scratch_operands = 0 : i64, tpu.core_type = #tpu.core_type<tc>, window_params = [{transform_indices = @transform_0, window_bounds = array<i64: 8, 32>}, {pipeline_mode = #tpu.pipeline_mode<synchronous>, transform_indices = @transform_1, window_bounds = array<i64: 32, 128>}, {pipeline_mode = #tpu.pipeline_mode<synchronous>, transform_indices = @transform_2, window_bounds = array<i64: 128, 12>}, {pipeline_mode = #tpu.pipeline_mode<synchronous>, transform_indices = @transform_3, window_bounds = array<i64: 2, 128>}, {transform_indices = @transform_4, window_bounds = array<i64: 8, 12>}]} {
    %c0 = arith.constant 0 : index
    %c0_0 = arith.constant 0 : index
    %0 = vector.load %arg1[%c0, %c0_0] : memref<8x32xf32, #tpu.memory_space<vmem>>, vector<8x32xf32>
    %c0_1 = arith.constant 0 : index
    %c0_2 = arith.constant 0 : index
    %1 = vector.load %arg2[%c0_1, %c0_2] : memref<32x128xf32, #tpu.memory_space<vmem>>, vector<32x128xf32>
    %cst = arith.constant dense<0.000000e+00> : vector<8x128xf32>
    %2 = tpu.matmul %0, %1, %cst {dimension_numbers = #tpu.dot_dimension_numbers<[1], [0], [0], [1], [0, 0, 1, 1], [], []>} : vector<8x32xf32>, vector<32x128xf32>, vector<8x128xf32> -> vector<8x128xf32>
    %c0_3 = arith.constant 0 : index
    %c0_4 = arith.constant 0 : index
    %3 = vector.load %arg4[%c0_3, %c0_4] : memref<2x128xf32, #tpu.memory_space<vmem>>, vector<1x128xf32>
    %4 = vector.broadcast %3 : vector<1x128xf32> to vector<8x128xf32>
    %5 = arith.addf %2, %4 : vector<8x128xf32>
    %cst_5 = arith.constant 0.000000e+00 : f32
    %6 = vector.broadcast %cst_5 : f32 to vector<8x128xf32>
    %7 = arith.maximumf %5, %6 : vector<8x128xf32>
    %c0_6 = arith.constant 0 : index
    %c0_7 = arith.constant 0 : index
    %8 = vector.load %arg3[%c0_6, %c0_7] : memref<128x12xf32, #tpu.memory_space<vmem>>, vector<128x12xf32>
    %cst_8 = arith.constant dense<0.000000e+00> : vector<8x12xf32>
    %9 = tpu.matmul %7, %8, %cst_8 {dimension_numbers = #tpu.dot_dimension_numbers<[1], [0], [0], [1], [0, 0, 1, 1], [], []>} : vector<8x128xf32>, vector<128x12xf32>, vector<8x12xf32> -> vector<8x12xf32>
    %c1 = arith.constant 1 : index
    %c0_9 = arith.constant 0 : index
    %10 = vector.load %arg4[%c1, %c0_9] : memref<2x128xf32, #tpu.memory_space<vmem>>, vector<1x12xf32>
    %11 = vector.broadcast %10 : vector<1x12xf32> to vector<8x12xf32>
    %12 = arith.addf %9, %11 : vector<8x12xf32>
    %c0_10 = arith.constant 0 : index
    %c0_11 = arith.constant 0 : index
    %13 = vector.load %arg5[%c0_10, %c0_11] : memref<8x12xf32, #tpu.memory_space<vmem>>, vector<8x12xf32>
    tpu.vector_store %arg5[%c0_10, %c0_11], %12 {strides = array<i32>} : memref<8x12xf32, #tpu.memory_space<vmem>>, vector<8x12xf32>,
    return
  }
  func.func @transform_0(%arg0: i32) -> (i32, i32) {
    %c0_i32 = arith.constant 0 : i32
    %c0_i32_0 = arith.constant 0 : i32
    return %arg0, %c0_i32 : i32, i32
  }
  func.func @transform_1(%arg0: i32) -> (i32, i32) {
    %c0_i32 = arith.constant 0 : i32
    %c0_i32_0 = arith.constant 0 : i32
    %c0_i32_1 = arith.constant 0 : i32
    return %c0_i32, %c0_i32_0 : i32, i32
  }
  func.func @transform_2(%arg0: i32) -> (i32, i32) {
    %c0_i32 = arith.constant 0 : i32
    %c0_i32_0 = arith.constant 0 : i32
    %c0_i32_1 = arith.constant 0 : i32
    return %c0_i32, %c0_i32_0 : i32, i32
  }
  func.func @transform_3(%arg0: i32) -> (i32, i32) {
    %c0_i32 = arith.constant 0 : i32
    %c0_i32_0 = arith.constant 0 : i32
    %c0_i32_1 = arith.constant 0 : i32
    return %c0_i32, %c0_i32_0 : i32, i32
  }
  func.func @transform_4(%arg0: i32) -> (i32, i32) {
    %c0_i32 = arith.constant 0 : i32
    %c0_i32_0 = arith.constant 0 : i32
    return %arg0, %c0_i32 : i32, i32
  }
}

</mosaic_0001>

<llo_original>
// kernel: tpu_custom_call.1
$region0: #{tpu_custom_call.1}
  #allocation0 [shape = 'u32[]', space=smem, size = 0x4, offset = 0x4, fixed_abs, tag = 'smem constant byte address 0x4 - core index']
  #allocation1 [shape = 'u32[144,128]{1,0:T(1,128)}', space=vmem, size = 0x12000, scoped, tag = 'internal scratch']
  %s0 = inlined_call_operand.vmem [shape: f32[8,32], index: 0, kind: input, shape index: {}]
  %s1 = inlined_call_operand.vmem [shape: f32[32,128], index: 1, kind: input, shape index: {}]
  %s2 = inlined_call_operand.vmem [shape: f32[128,12], index: 2, kind: input, shape index: {}]
  %s3 = inlined_call_operand.vmem [shape: f32[2,128], index: 3, kind: input, shape index: {}]
  %s4 = inlined_call_operand.hbm [shape: f32[8,12], index: 4, kind: output, shape index: {}]
  %s5 = sld [smem:[#allocation0]]
  $region26: #{tpu_custom_call.1} parent=0
    _
  %s7 = ssub.s32 1, %s5
  %s8 = scalar_select 0, %s7, %s5
  $region1: #{tpu_custom_call.1} parent=0
    #allocation2 [shape = 'u8[4096]{0}', space=vmem, size = 0x1000, scoped, tag = 'output window, operand 0, single buffered']
    #allocation3 [shape = 's32[1]{0}', space=sflag, size = 0x4, scoped, tag = 'scoped memory for tpu_custom_call.1']
    %9 = vsyncpa [#allocation3], 0
    // Predicated region
    $region2: #{tpu_custom_call.1} parent=1 // pred_check
      _
    $region3: #{tpu_custom_call.1} parent=1 // pred_check_branch
      %11 = sbr.rel (0) target = $region5
    $region4: #{tpu_custom_call.1} parent=1 // pred_region
      _
    $region5: #{tpu_custom_call.1} parent=1 // pred_fallthru
      _
    // Predicated region
    $region6: #{tpu_custom_call.1} parent=1 // pred_check
      _
    $region7: #{tpu_custom_call.1} parent=1 // pred_check_branch
      %13 = sbr.rel (0) target = $region9
    $region8: #{tpu_custom_call.1} parent=1 // pred_region
      _
    $region9: #{tpu_custom_call.1} parent=1 // pred_fallthru
      _
    // Predicated region
    $region10: #{tpu_custom_call.1} parent=1 // pred_check
      _
    $region11: #{tpu_custom_call.1} parent=1 // pred_check_branch
      %15 = sbr.rel (0) target = $region13
    $region12: #{tpu_custom_call.1} parent=1 // pred_region
      _
    $region13: #{tpu_custom_call.1} parent=1 // pred_fallthru
      _
    // Predicated region
    $region14: #{tpu_custom_call.1} parent=1 // pred_check
      _
    $region15: #{tpu_custom_call.1} parent=1 // pred_check_branch
      %17 = sbr.rel (0) target = $region17
    $region16: #{tpu_custom_call.1} parent=1 // pred_region
      _
    $region17: #{tpu_custom_call.1} parent=1 // pred_fallthru
      _
    %v18 = vld [vmem:[%s0] sm:$0xff]
    %v19 = vld [vmem:[%s1] sm:$0xff]
    %v20 = vld [vmem:[%s1 + $0x8] sm:$0xff]
    %v21 = vld [vmem:[%s1 + $0x10] sm:$0xff]
    %v22 = vld [vmem:[%s1 + $0x18] sm:$0xff]
    %v23 = vld [vmem:[%s3] sm:$0x1]
    %v24 = vlaneseq
    %v25 = vshrl.u32 %v24, 7
    %v26 = vsub.s32 0, %v25
    %v27 = vrot.slane %v23, %v26
    %vm28 = vcmask 261120
    %v30 = vsel %vm28, %v18, 0
    %32 = vmatprep.subr.mxu0 0.0
    %33 = vmatpush1.msra.mxu0 0.0
    %34 = vmatprep.subr.mxu0 0.0
    %35 = vmatpush1.msra.mxu0 0.0
    %36 = vmatprep.subr.mxu0 0.0
    %37 = vmatpush1.msra.mxu0 0.0
    %38 = vmatprep.subr.mxu0 0.0
    %39 = vmatpush1.msra.mxu0 0.0
    %40 = vmatprep.subr.mxu0 0.0
    %41 = vmatpush1.msra.mxu0 0.0
    %42 = vmatprep.subr.mxu0 0.0
    %43 = vmatpush1.msra.mxu0 0.0
    %44 = vmatprep.subr.mxu0 0.0
    %45 = vmatpush1.msra.mxu0 0.0
    %46 = vmatprep.subr.mxu0 0.0
    %47 = vmatpush1.msra.mxu0 0.0
    %48 = vmatprep.subr.mxu0 0.0
    %49 = vmatpush1.msra.mxu0 0.0
    %50 = vmatprep.subr.mxu0 0.0
    %51 = vmatpush1.msra.mxu0 0.0
    %52 = vmatprep.subr.mxu0 0.0
    %53 = vmatpush1.msra.mxu0 0.0
    %54 = vmatprep.subr.mxu0 0.0
    %55 = vmatpush1.msra.mxu0 0.0
    %56 = vmatprep.subr.mxu0 0.0
    %57 = vmatpush1.msra.mxu0 %v22
    %58 = vmatprep.subr.mxu0 0.0
    %59 = vmatpush1.msra.mxu0 %v21
    %60 = vmatprep.subr.mxu0 0.0
    %61 = vmatpush1.msra.mxu0 %v20
    %62 = vmatprep.subr.mxu0 0.0
    %63 = vmatpush1.msra.mxu0 %v19
    %64 = vmatprep.subr.mxu0 0.0
    %65 = vmatpush2.msra.mxu0 0.0
    %66 = vmatprep.subr.mxu0 0.0
    %67 = vmatpush2.msra.mxu0 0.0
    %68 = vmatprep.subr.mxu0 0.0
    %69 = vmatpush2.msra.mxu0 0.0
    %70 = vmatprep.subr.mxu0 0.0
    %71 = vmatpush2.msra.mxu0 0.0
    %72 = vmatprep.subr.mxu0 0.0
    %73 = vmatpush2.msra.mxu0 0.0
    %74 = vmatprep.subr.mxu0 0.0
    %75 = vmatpush2.msra.mxu0 0.0
    %76 = vmatprep.subr.mxu0 0.0
    %77 = vmatpush2.msra.mxu0 0.0
    %78 = vmatprep.subr.mxu0 0.0
    %79 = vmatpush2.msra.mxu0 0.0
    %80 = vmatprep.subr.mxu0 0.0
    %81 = vmatpush2.msra.mxu0 0.0
    %82 = vmatprep.subr.mxu0 0.0
    %83 = vmatpush2.msra.mxu0 0.0
    %84 = vmatprep.subr.mxu0 0.0
    %85 = vmatpush2.msra.mxu0 0.0
    %86 = vmatprep.subr.mxu0 0.0
    %87 = vmatpush2.msra.mxu0 0.0
    %88 = vmatprep.subr.mxu0 0.0
    %89 = vmatpush2.msra.mxu0 0.0
    %90 = vmatprep.subr.mxu0 0.0
    %91 = vmatpush2.msra.mxu0 0.0
    %92 = vmatprep.subr.mxu0 0.0
    %93 = vmatpush2.msra.mxu0 0.0
    %94 = vmatprep.subr.mxu0 0.0
    %95 = vmatpush2.msra.mxu0 0.0
    %96 = vmatprep.mubr.f32.mxu0 0.0
    %97 = vmatmul.mubr.f32.gmra.mxu0 %v30
    %v98 = vpop.f32.mrf.mxu0
    %v99 = vadd.f32 %v27, %v98
    %v100 = vpop.f32.mrf.mxu0
    %101 = vdwg.mxu0
    %v102 = vmax.f32 %v99, 0.0
    %v103 = vld [vmem:[%s2] sm:$0xff]
    %v104 = vld [vmem:[%s2 + $0x8] sm:$0xff]
    %v105 = vld [vmem:[%s2 + $0x10] sm:$0xff]
    %v106 = vld [vmem:[%s2 + $0x18] sm:$0xff]
    %v107 = vld [vmem:[%s2 + $0x20] sm:$0xff]
    %v108 = vld [vmem:[%s2 + $0x28] sm:$0xff]
    %v109 = vld [vmem:[%s2 + $0x30] sm:$0xff]
    %v110 = vld [vmem:[%s2 + $0x38] sm:$0xff]
    %v111 = vld [vmem:[%s2 + $0x40] sm:$0xff]
    %v112 = vld [vmem:[%s2 + $0x48] sm:$0xff]
    %v113 = vld [vmem:[%s2 + $0x50] sm:$0xff]
    %v114 = vld [vmem:[%s2 + $0x58] sm:$0xff]
    %v115 = vld [vmem:[%s2 + $0x60] sm:$0xff]
    %v116 = vld [vmem:[%s2 + $0x68] sm:$0xff]
    %v117 = vld [vmem:[%s2 + $0x70] sm:$0xff]
    %v118 = vld [vmem:[%s2 + $0x78] sm:$0xff]
    %v119 = vld [vmem:[%s3 + $0x1] sm:$0x1]
    %v120 = vlaneseq
    %v121 = vshrl.u32 %v120, 7
    %v122 = vsub.s32 0, %v121
    %v123 = vrot.slane %v119, %v122
    %124 = vmatprep.subr.mxu0 0.0
    %125 = vmatpush1.msra.mxu0 %v118
    %126 = vmatprep.subr.mxu0 0.0
    %127 = vmatpush1.msra.mxu0 %v117
    %128 = vmatprep.subr.mxu0 0.0
    %129 = vmatpush1.msra.mxu0 %v116
    %130 = vmatprep.subr.mxu0 0.0
    %131 = vmatpush1.msra.mxu0 %v115
    %132 = vmatprep.subr.mxu0 0.0
    %133 = vmatpush1.msra.mxu0 %v114
    %134 = vmatprep.subr.mxu0 0.0
    %135 = vmatpush1.msra.mxu0 %v113
    %136 = vmatprep.subr.mxu0 0.0
    %137 = vmatpush1.msra.mxu0 %v112
    %138 = vmatprep.subr.mxu0 0.0
    %139 = vmatpush1.msra.mxu0 %v111
    %140 = vmatprep.subr.mxu0 0.0
    %141 = vmatpush1.msra.mxu0 %v110
    %142 = vmatprep.subr.mxu0 0.0
    %143 = vmatpush1.msra.mxu0 %v109
    %144 = vmatprep.subr.mxu0 0.0
    %145 = vmatpush1.msra.mxu0 %v108
    %146 = vmatprep.subr.mxu0 0.0
    %147 = vmatpush1.msra.mxu0 %v107
    %148 = vmatprep.subr.mxu0 0.0
    %149 = vmatpush1.msra.mxu0 %v106
    %150 = vmatprep.subr.mxu0 0.0
    %151 = vmatpush1.msra.mxu0 %v105
    %152 = vmatprep.subr.mxu0 0.0
    %153 = vmatpush1.msra.mxu0 %v104
    %154 = vmatprep.subr.mxu0 0.0
    %155 = vmatpush1.msra.mxu0 %v103
    %156 = vmatprep.subr.mxu0 0.0
    %157 = vmatpush2.msra.mxu0 0.0
    %158 = vmatprep.subr.mxu0 0.0
    %159 = vmatpush2.msra.mxu0 0.0
    %160 = vmatprep.subr.mxu0 0.0
    %161 = vmatpush2.msra.mxu0 0.0
    %162 = vmatprep.subr.mxu0 0.0
    %163 = vmatpush2.msra.mxu0 0.0
    %164 = vmatprep.subr.mxu0 0.0
    %165 = vmatpush2.msra.mxu0 0.0
    %166 = vmatprep.subr.mxu0 0.0
    %167 = vmatpush2.msra.mxu0 0.0
    %168 = vmatprep.subr.mxu0 0.0
    %169 = vmatpush2.msra.mxu0 0.0
    %170 = vmatprep.subr.mxu0 0.0
    %171 = vmatpush2.msra.mxu0 0.0
    %172 = vmatprep.subr.mxu0 0.0
    %173 = vmatpush2.msra.mxu0 0.0
    %174 = vmatprep.subr.mxu0 0.0
    %175 = vmatpush2.msra.mxu0 0.0
    %176 = vmatprep.subr.mxu0 0.0
    %177 = vmatpush2.msra.mxu0 0.0
    %178 = vmatprep.subr.mxu0 0.0
    %179 = vmatpush2.msra.mxu0 0.0
    %180 = vmatprep.subr.mxu0 0.0
    %181 = vmatpush2.msra.mxu0 0.0
    %182 = vmatprep.subr.mxu0 0.0
    %183 = vmatpush2.msra.mxu0 0.0
    %184 = vmatprep.subr.mxu0 0.0
    %185 = vmatpush2.msra.mxu0 0.0
    %186 = vmatprep.subr.mxu0 0.0
    %187 = vmatpush2.msra.mxu0 0.0
    %188 = vmatprep.mubr.f32.mxu0 0.0
    %189 = vmatmul.mubr.f32.gmra.mxu0 %v102
    %v190 = vpop.f32.mrf.mxu0
    %v191 = vadd.f32 %v123, %v190
    %v192 = vpop.f32.mrf.mxu0
    %193 = vdwg.mxu0
    %vm194 = vcmask 97280
    %195 = vst.msk [vmem:[#allocation2] sm:$0xff] %vm194, %v191
    // Predicated region
    $region18: #{tpu_custom_call.1} parent=1 // pred_check
      _
    $region19: #{tpu_custom_call.1} parent=1 // pred_check_branch
      %197 = sbr.rel (0) target = $region21
    $region20: #{tpu_custom_call.1} parent=1 // pred_region
      %s199 = ssub.s32 128, 128
      %200 = vsyncadd [#allocation3], %s199
      %s202 = sshll.u32 [#allocation2], 4
      %s203 = int_to_ptr.vmem [resolvable:$true] %s202
      %205 = dma.vmem_to_hbm [thread:$0]  %s203, 128, %s4, [#allocation3]
    $region21: #{tpu_custom_call.1} parent=1 // pred_fallthru
      _
    // Predicated region
    $region22: #{tpu_custom_call.1} parent=1 // pred_check
      _
    $region23: #{tpu_custom_call.1} parent=1 // pred_check_branch
      %207 = sbr.rel (0) target = $region25
    $region24: #{tpu_custom_call.1} parent=1 // pred_region
      %208 = dma.done [#allocation3], 128
    $region25: #{tpu_custom_call.1} parent=1 // pred_fallthru
      _
    %209 = vsyncpa [#allocation3], 1

</llo_original>
